<compile_context>
chip_gen: v7x
topology: tpu7x:2x2x1
jax: 0.10.0
libtpu: 0.0.40
codegen_flags: <defaults>
</compile_context>

<pallas_src>
import functools

import numpy as np
import jax
import jax.numpy as jnp
from jax.experimental import pallas as pl
from jax.experimental.pallas import tpu as pltpu


def make_kernel(k):
    """Mirror of the PyTorch make_kernel: 1-D -> outer product, normalize."""
    k = np.asarray(k, dtype=np.float32)
    if k.ndim == 1:
        k = np.outer(k, k)
    k = k / k.sum()
    return k


# ---------------------------------------------------------------------------
# Kernel bodies
# ---------------------------------------------------------------------------
def _pairwise_accumulate(term_fns):
    """Sum lazily built f32 terms two at a time: keeps the accumulator a live
    value (no per-tap read-modify-write of a VMEM accumulator) and halves the
    dependent-add chain length."""
    acc = None
    for a in range(0, len(term_fns), 2):
        pair = term_fns[a:a + 2]
        t = pair[0]()
        if len(pair) == 2:
            t = t + pair[1]()
        acc = t if acc is None else acc + t
    return acc


def _downsample_sep_kernel(x_ref, o_ref, g_ref, *, htaps, vtaps, f, Ho, Wo,
                           HqG):
    # x_ref: (f, f, Hq, Wq, cn) polyphase padded input block (channels on
    #        lanes); g_ref: (f, HqG, Wo, cn) float32 horizontal-pass scratch;
    # o_ref: (Ho, Wo, cn) output block.
    # Horizontal (W) FIR + W-downsample into the scratch, one H-phase at a
    # time.  The stride-f subsampling is encoded in the polyphase layout, so
    # every slice is unit-stride and the hot loop is pure VPU multiply-adds.
    for ph in range(f):
        g_ref[ph] = _pairwise_accumulate([
            (lambda ph=ph, pw=pw, qw=qw, w=w:
                 w * x_ref[ph, pw, 0:HqG, qw:qw + Wo, :].astype(jnp.float32))
            for (pw, qw, w) in htaps])
    # Vertical (H) FIR + H-downsample reading strips of the scratch.
    acc = _pairwise_accumulate([
        (lambda ph=ph, qh=qh, w=w: w * g_ref[ph, qh:qh + Ho, :, :])
        for (ph, qh, w) in vtaps])
    o_ref[...] = acc.astype(o_ref.dtype)


def _downsample_full_kernel(x_ref, o_ref, *, taps, Ho, Wo):
    # Fallback for non-separable 2-D kernels: direct kh*kw-tap accumulate,
    # taps fused pairwise to keep the accumulator a live value.
    acc = _pairwise_accumulate([
        (lambda ph=ph, pw=pw, qh=qh, qw=qw, w=w:
             w * x_ref[ph, pw, qh:qh + Ho, qw:qw + Wo, :].astype(jnp.float32))
        for (ph, pw, qh, qw, w) in taps])
    o_ref[...] = acc.astype(o_ref.dtype)


# ---------------------------------------------------------------------------
# Block sizing helpers
# ---------------------------------------------------------------------------
def _tpu_vmem_capacity_bytes():
    try:
        info = pltpu.get_tpu_info()
        cap = int(getattr(info, "vmem_capacity_bytes", 0) or 0)
        if cap > 0:
            return cap
    except Exception:
        pass
    return 64 << 20  # conservative default: v7x has 64 MiB VMEM per core


def _pick_channel_block(npad, per_channel_bytes, budget_bytes):
    """Largest lane-dense (multiple-of-128) channel block that divides `npad`
    and whose double-buffered footprint fits `budget_bytes`; split once more
    if that leaves a 1-step grid (v7x megacore wants >= 2 grid steps)."""
    if npad <= 128 or npad % 128 != 0:
        # Small-N path: single block, N stays on lanes as-is (masked stores).
        return npad

    def best_div(limit):
        best, c = 128, 128
        while c <= limit:
            if npad % c == 0:
                best = c
            c += 128
        return best

    cap = max(128, (budget_bytes // max(per_channel_bytes, 1)) // 128 * 128)
    cn = best_div(min(npad, cap))
    if npad // cn < 2 and npad >= 256:
        cn = best_div(npad // 2)
    return cn


def _separate_fir(kf):
    """Rank-1 (separable) factorization of the flipped FIR kernel, or None."""
    u, s, vt = np.linalg.svd(kf.astype(np.float64))
    if s.size > 1 and s[1] > 1e-6 * max(s[0], 1e-30):
        return None
    kv = u[:, 0] * np.sqrt(s[0])
    kw = vt[0, :] * np.sqrt(s[0])
    return kv, kw


# ---------------------------------------------------------------------------
# Wrapper
# ---------------------------------------------------------------------------
def downsample_upfirdn2d(x, kernel2d, factor, pad):
    """upfirdn2d(x, kernel2d, up=1, down=factor, pad=pad) for NCHW input."""
    assert x.ndim == 4, "expected NCHW input"
    B, C, H, W = x.shape
    f = int(factor)
    pad0, pad1 = pad
    # TODO(synk): negative pads (cropping) are not needed for Downsample
    # (kernel >= factor) and are not implemented here.
    assert pad0 >= 0 and pad1 >= 0, "negative pads not supported"
    kernel2d = np.asarray(kernel2d, dtype=np.float32)
    kh, kw = kernel2d.shape

    Hp = H + pad0 + pad1
    Wp = W + pad0 + pad1
    Ho = (Hp - kh) // f + 1
    Wo = (Wp - kw) // f + 1
    assert Ho > 0 and Wo > 0
    Hq = -(-Hp // f)           # ceil(Hp / f); rounding rows/cols are zeros
    Wq = -(-Wp // f)
    HqG = Ho + (kh - 1) // f   # rows of the horizontal-pass scratch

    # Channel padding: lane-dense blocks (multiple of 128) avoid masked
    # vst.msk partial stores.  Only pad when N > 128; for tiny N padding
    # would multiply HBM traffic instead of helping.
    # TODO(synk): for N < 128 with large feature maps, an (N, Ho, Wo)-style
    # layout with Wo on lanes would recover lane density; not implemented.
    N = B * C
    Cpad = C
    if N > 128 and N % 128 != 0:
        while (B * Cpad) % 128 != 0:
            Cpad += 1
    Npad = B * Cpad

    # ---- XLA-side prep: ONE pad + ONE fused polyphase transpose -----------
    # (B,C,H,W) -pad-> (B,Cp,Hq*f,Wq*f) -reshape/transpose-> (f,f,Hq,Wq,N).
    # TODO(synk): the NCHW<->channels-last relayouts (including the output
    # transpose below) should ideally be hoisted to the model level / fused
    # with neighbouring convs; they are kept only to preserve the PyTorch
    # module's NCHW interface.
    xpad = jnp.pad(x, ((0, 0), (0, Cpad - C),
                       (pad0, pad1 + Hq * f - Hp),
                       (pad0, pad1 + Wq * f - Wp)))
    xph = xpad.reshape(B, Cpad, Hq, f, Wq, f)
    xph = jnp.transpose(xph, (3, 5, 2, 4, 0, 1)).reshape(f, f, Hq, Wq, Npad)

    # upfirdn2d correlates with the flipped kernel (== convolution with the
    # original kernel).
    kf = np.flip(kernel2d.astype(np.float64), (0, 1))
    sep = _separate_fir(kf)

    itemsize = jnp.dtype(x.dtype).itemsize
    vmem_cap = _tpu_vmem_capacity_bytes()
    block_budget = min(vmem_cap * 3 // 8, 48 << 20)  # ~24 MiB v7x, 48 MiB v5e/v6e
    vmem_limit = int(min(vmem_cap * 3 // 4, 100 << 20))

    per_channel = (2 * f * f * Hq * Wq * itemsize     # double-buffered input
                   + 2 * Ho * Wo * itemsize           # double-buffered output
                   + f * HqG * Wo * 4)                # f32 separable scratch
    cn = _pick_channel_block(Npad, per_channel, block_budget)
    grid = (Npad // cn,)
    # TODO(synk): very large feature maps with few channels still need an Ho
    # grid axis with a halo (manual DMA or wrapper-side overlapping row
    # split) to decouple VMEM fit from image size; not implemented here.

    if sep is not None:
        kvf, kwf = sep
        htaps = tuple((j % f, j // f, float(kwf[j]))
                      for j in range(kw) if kwf[j] != 0.0)
        vtaps = tuple((i % f, i // f, float(kvf[i]))
                      for i in range(kh) if kvf[i] != 0.0)
        assert htaps and vtaps
        kernel = functools.partial(_downsample_sep_kernel, htaps=htaps,
                                   vtaps=vtaps, f=f, Ho=Ho, Wo=Wo, HqG=HqG)
        scratch_shapes = [pltpu.VMEM((f, HqG, Wo, cn), jnp.float32)]
        n_madds = len(htaps) * f * HqG + len(vtaps) * Ho
    else:
        taps = tuple((i % f, j % f, i // f, j // f, float(kf[i, j]))
                     for i in range(kh) for j in range(kw) if kf[i, j] != 0.0)
        assert taps
        kernel = functools.partial(_downsample_full_kernel, taps=taps,
                                   Ho=Ho, Wo=Wo)
        scratch_shapes = []
        n_madds = len(taps) * Ho

    # NOTE: if xprof ever shows exposed DMA latency, the input spec can be
    # given pipeline_mode=pl.Buffered(3); default double-buffering is fine.
    out = pl.pallas_call(
        kernel,
        out_shape=jax.ShapeDtypeStruct((Ho, Wo, Npad), x.dtype),
        grid=grid,
        in_specs=[pl.BlockSpec((f, f, Hq, Wq, cn),
                               lambda c: (0, 0, 0, 0, c))],
        out_specs=pl.BlockSpec((Ho, Wo, cn), lambda c: (0, 0, c)),
        scratch_shapes=scratch_shapes,
        compiler_params=pltpu.CompilerParams(
            dimension_semantics=("parallel",),
            vmem_limit_bytes=vmem_limit),
        cost_estimate=pl.CostEstimate(
            flops=2 * n_madds * Wo * Npad,
            transcendentals=0,
            bytes_accessed=itemsize * Npad * (f * f * Hq * Wq + Ho * Wo)),
    )(xph)

    # (Ho, Wo, Npad) -> NCHW (dropping any channel padding).
    return out.reshape(Ho, Wo, B, Cpad).transpose(2, 3, 0, 1)[:, :C]


class Downsample:
    """Pallas port of the PyTorch Downsample module (FIR blur + subsample)."""

    def __init__(self, kernel, factor=2):
        self.factor = factor
        self.kernel2d = make_kernel(kernel)
        p = self.kernel2d.shape[0] - factor
        self.pad = ((p + 1) // 2, p // 2)

    def __call__(self, x):
        return downsample_upfirdn2d(x, self.kernel2d, self.factor, self.pad)


def _reference_downsample(x, kernel2d, factor, pad):
    """Pure-JAX (XLA) reference of upfirdn2d(up=1, down=factor, pad)."""
    B, C, H, W = x.shape
    kh, kw = kernel2d.shape
    pad0, pad1 = pad
    xp = jnp.pad(x, ((0, 0), (0, 0), (pad0, pad1), (pad0, pad1)))
    kf = np.flip(np.asarray(kernel2d, np.float32), (0, 1))
    Ho = (H + pad0 + pad1 - kh) // factor + 1
    Wo = (W + pad0 + pad1 - kw) // factor + 1
    out = jnp.zeros((B, C, Ho, Wo), jnp.float32)
    for i in range(kh):
        for j in range(kw):
            out = out + float(kf[i, j]) * xp[:, :,
                                             i:i + factor * Ho:factor,
                                             j:j + factor * Wo:factor]
    return out.astype(x.dtype)


if __name__ == "__main__":
    key = jax.random.PRNGKey(0)
    ds = Downsample(kernel=[1, 3, 3, 1], factor=2)

    # Shapes exercising: tiny-N path (the module's small demo shape),
    # lane-dense multi-block path (N = 256 -> 2 grid steps), and the
    # channel-padding path (N = 130, padded to 256 lanes).
    shapes = [(2, 4, 16, 16), (2, 128, 16, 16), (2, 65, 16, 16)]
    for idx, shape in enumerate(shapes):
        x = jax.random.normal(jax.random.fold_in(key, idx), shape,
                              dtype=jnp.float32)
        out = jax.block_until_ready(ds(x))
        ref = _reference_downsample(x, ds.kernel2d, ds.factor, ds.pad)
        B, C, H, W = shape
        assert out.shape == (B, C, H // 2, W // 2), out.shape
        assert out.dtype == x.dtype
        err = float(jnp.max(jnp.abs(out - ref)))
        assert jnp.allclose(out, ref, atol=1e-5, rtol=1e-5), (shape, err)

    print("KERNEL_OK")
</pallas_src>

<mosaic_0001>
module attributes {stable_mosaic.version = 11 : i64} {
  func.func @_downsample_sep_kernel(%arg0: i32, %arg1: memref<2x2x9x9x8xf32, #tpu.memory_space<vmem>>, %arg2: memref<8x8x8xf32, #tpu.memory_space<vmem>>, %arg3: memref<2x9x8x8xf32, #tpu.memory_space<vmem>>) attributes {dimension_semantics = [#tpu.dimension_semantics<parallel>], iteration_bounds = array<i64: 1>, scalar_prefetch = 0 : i64, scratch_operands = 1 : i64, tpu.core_type = #tpu.core_type<tc>, window_params = [{transform_indices = @transform_0, window_bounds = array<i64: 2, 2, 9, 9, 8>}, {transform_indices = @transform_1, window_bounds = array<i64: 8, 8, 8>}]} {
    %c0 = arith.constant 0 : index
    %c0_0 = arith.constant 0 : index
    %c0_1 = arith.constant 0 : index
    %c0_2 = arith.constant 0 : index
    %c0_3 = arith.constant 0 : index
    %0 = vector.load %arg1[%c0, %c0_0, %c0_1, %c0_2, %c0_3] : memref<2x2x9x9x8xf32, #tpu.memory_space<vmem>>, vector<1x1x9x8x8xf32>
    %1 = vector.shape_cast %0 : vector<1x1x9x8x8xf32> to vector<9x8x8xf32>
    %cst = arith.constant -1.250000e-01 : f32
    %2 = vector.broadcast %cst : f32 to vector<9x8x8xf32>
    %3 = arith.mulf %2, %1 : vector<9x8x8xf32>
    %c0_4 = arith.constant 0 : index
    %c1 = arith.constant 1 : index
    %c0_5 = arith.constant 0 : index
    %c0_6 = arith.constant 0 : index
    %c0_7 = arith.constant 0 : index
    %4 = vector.load %arg1[%c0_4, %c1, %c0_5, %c0_6, %c0_7] : memref<2x2x9x9x8xf32, #tpu.memory_space<vmem>>, vector<1x1x9x8x8xf32>
    %5 = vector.shape_cast %4 : vector<1x1x9x8x8xf32> to vector<9x8x8xf32>
    %cst_8 = arith.constant -3.750000e-01 : f32
    %6 = vector.broadcast %cst_8 : f32 to vector<9x8x8xf32>
    %7 = arith.mulf %6, %5 : vector<9x8x8xf32>
    %8 = arith.addf %3, %7 : vector<9x8x8xf32>
    %c0_9 = arith.constant 0 : index
    %c0_10 = arith.constant 0 : index
    %c0_11 = arith.constant 0 : index
    %c1_12 = arith.constant 1 : index
    %c0_13 = arith.constant 0 : index
    %9 = vector.load %arg1[%c0_9, %c0_10, %c0_11, %c1_12, %c0_13] : memref<2x2x9x9x8xf32, #tpu.memory_space<vmem>>, vector<1x1x9x8x8xf32>
    %10 = vector.shape_cast %9 : vector<1x1x9x8x8xf32> to vector<9x8x8xf32>
    %cst_14 = arith.constant -3.750000e-01 : f32
    %11 = vector.broadcast %cst_14 : f32 to vector<9x8x8xf32>
    %12 = arith.mulf %11, %10 : vector<9x8x8xf32>
    %c0_15 = arith.constant 0 : index
    %c1_16 = arith.constant 1 : index
    %c0_17 = arith.constant 0 : index
    %c1_18 = arith.constant 1 : index
    %c0_19 = arith.constant 0 : index
    %13 = vector.load %arg1[%c0_15, %c1_16, %c0_17, %c1_18, %c0_19] : memref<2x2x9x9x8xf32, #tpu.memory_space<vmem>>, vector<1x1x9x8x8xf32>
    %14 = vector.shape_cast %13 : vector<1x1x9x8x8xf32> to vector<9x8x8xf32>
    %cst_20 = arith.constant -1.250000e-01 : f32
    %15 = vector.broadcast %cst_20 : f32 to vector<9x8x8xf32>
    %16 = arith.mulf %15, %14 : vector<9x8x8xf32>
    %17 = arith.addf %12, %16 : vector<9x8x8xf32>
    %18 = arith.addf %8, %17 : vector<9x8x8xf32>
    %c0_21 = arith.constant 0 : index
    %c0_22 = arith.constant 0 : index
    %c0_23 = arith.constant 0 : index
    %c0_24 = arith.constant 0 : index
    %19 = vector.load %arg3[%c0_21, %c0_22, %c0_23, %c0_24] : memref<2x9x8x8xf32, #tpu.memory_space<vmem>>, vector<1x9x8x8xf32>
    %20 = vector.shape_cast %19 : vector<1x9x8x8xf32> to vector<9x8x8xf32>
    %21 = vector.shape_cast %18 : vector<9x8x8xf32> to vector<1x9x8x8xf32>
    tpu.vector_store %arg3[%c0_21, %c0_22, %c0_23, %c0_24], %21 {strides = array<i32>} : memref<2x9x8x8xf32, #tpu.memory_space<vmem>>, vector<1x9x8x8xf32>,
    %c1_25 = arith.constant 1 : index
    %c0_26 = arith.constant 0 : index
    %c0_27 = arith.constant 0 : index
    %c0_28 = arith.constant 0 : index
    %c0_29 = arith.constant 0 : index
    %22 = vector.load %arg1[%c1_25, %c0_26, %c0_27, %c0_28, %c0_29] : memref<2x2x9x9x8xf32, #tpu.memory_space<vmem>>, vector<1x1x9x8x8xf32>
    %23 = vector.shape_cast %22 : vector<1x1x9x8x8xf32> to vector<9x8x8xf32>
    %cst_30 = arith.constant -1.250000e-01 : f32
    %24 = vector.broadcast %cst_30 : f32 to vector<9x8x8xf32>
    %25 = arith.mulf %24, %23 : vector<9x8x8xf32>
    %c1_31 = arith.constant 1 : index
    %c1_32 = arith.constant 1 : index
    %c0_33 = arith.constant 0 : index
    %c0_34 = arith.constant 0 : index
    %c0_35 = arith.constant 0 : index
    %26 = vector.load %arg1[%c1_31, %c1_32, %c0_33, %c0_34, %c0_35] : memref<2x2x9x9x8xf32, #tpu.memory_space<vmem>>, vector<1x1x9x8x8xf32>
    %27 = vector.shape_cast %26 : vector<1x1x9x8x8xf32> to vector<9x8x8xf32>
    %cst_36 = arith.constant -3.750000e-01 : f32
    %28 = vector.broadcast %cst_36 : f32 to vector<9x8x8xf32>
    %29 = arith.mulf %28, %27 : vector<9x8x8xf32>
    %30 = arith.addf %25, %29 : vector<9x8x8xf32>
    %c1_37 = arith.constant 1 : index
    %c0_38 = arith.constant 0 : index
    %c0_39 = arith.constant 0 : index
    %c1_40 = arith.constant 1 : index
    %c0_41 = arith.constant 0 : index
    %31 = vector.load %arg1[%c1_37, %c0_38, %c0_39, %c1_40, %c0_41] : memref<2x2x9x9x8xf32, #tpu.memory_space<vmem>>, vector<1x1x9x8x8xf32>
    %32 = vector.shape_cast %31 : vector<1x1x9x8x8xf32> to vector<9x8x8xf32>
    %cst_42 = arith.constant -3.750000e-01 : f32
    %33 = vector.broadcast %cst_42 : f32 to vector<9x8x8xf32>
    %34 = arith.mulf %33, %32 : vector<9x8x8xf32>
    %c1_43 = arith.constant 1 : index
    %c1_44 = arith.constant 1 : index
    %c0_45 = arith.constant 0 : index
    %c1_46 = arith.constant 1 : index
    %c0_47 = arith.constant 0 : index
    %35 = vector.load %arg1[%c1_43, %c1_44, %c0_45, %c1_46, %c0_47] : memref<2x2x9x9x8xf32, #tpu.memory_space<vmem>>, vector<1x1x9x8x8xf32>
    %36 = vector.shape_cast %35 : vector<1x1x9x8x8xf32> to vector<9x8x8xf32>
    %cst_48 = arith.constant -1.250000e-01 : f32
    %37 = vector.broadcast %cst_48 : f32 to vector<9x8x8xf32>
    %38 = arith.mulf %37, %36 : vector<9x8x8xf32>
    %39 = arith.addf %34, %38 : vector<9x8x8xf32>
    %40 = arith.addf %30, %39 : vector<9x8x8xf32>
    %c1_49 = arith.constant 1 : index
    %c0_50 = arith.constant 0 : index
    %c0_51 = arith.constant 0 : index
    %c0_52 = arith.constant 0 : index
    %41 = vector.load %arg3[%c1_49, %c0_50, %c0_51, %c0_52] : memref<2x9x8x8xf32, #tpu.memory_space<vmem>>, vector<1x9x8x8xf32>
    %42 = vector.shape_cast %41 : vector<1x9x8x8xf32> to vector<9x8x8xf32>
    %43 = vector.shape_cast %40 : vector<9x8x8xf32> to vector<1x9x8x8xf32>
    tpu.vector_store %arg3[%c1_49, %c0_50, %c0_51, %c0_52], %43 {strides = array<i32>} : memref<2x9x8x8xf32, #tpu.memory_space<vmem>>, vector<1x9x8x8xf32>,
    %c0_53 = arith.constant 0 : index
    %c0_54 = arith.constant 0 : index
    %c0_55 = arith.constant 0 : index
    %c0_56 = arith.constant 0 : index
    %44 = vector.load %arg3[%c0_53, %c0_54, %c0_55, %c0_56] : memref<2x9x8x8xf32, #tpu.memory_space<vmem>>, vector<1x8x8x8xf32>
    %45 = vector.shape_cast %44 : vector<1x8x8x8xf32> to vector<8x8x8xf32>
    %cst_57 = arith.constant -1.250000e-01 : f32
    %46 = vector.broadcast %cst_57 : f32 to vector<8x8x8xf32>
    %47 = arith.mulf %46, %45 : vector<8x8x8xf32>
    %c1_58 = arith.constant 1 : index
    %c0_59 = arith.constant 0 : index
    %c0_60 = arith.constant 0 : index
    %c0_61 = arith.constant 0 : index
    %48 = vector.load %arg3[%c1_58, %c0_59, %c0_60, %c0_61] : memref<2x9x8x8xf32, #tpu.memory_space<vmem>>, vector<1x8x8x8xf32>
    %49 = vector.shape_cast %48 : vector<1x8x8x8xf32> to vector<8x8x8xf32>
    %cst_62 = arith.constant -3.750000e-01 : f32
    %50 = vector.broadcast %cst_62 : f32 to vector<8x8x8xf32>
    %51 = arith.mulf %50, %49 : vector<8x8x8xf32>
    %52 = arith.addf %47, %51 : vector<8x8x8xf32>
    %c0_63 = arith.constant 0 : index
    %c1_64 = arith.constant 1 : index
    %c0_65 = arith.constant 0 : index
    %c0_66 = arith.constant 0 : index
    %53 = vector.load %arg3[%c0_63, %c1_64, %c0_65, %c0_66] : memref<2x9x8x8xf32, #tpu.memory_space<vmem>>, vector<1x8x8x8xf32>
    %54 = vector.shape_cast %53 : vector<1x8x8x8xf32> to vector<8x8x8xf32>
    %cst_67 = arith.constant -3.750000e-01 : f32
    %55 = vector.broadcast %cst_67 : f32 to vector<8x8x8xf32>
    %56 = arith.mulf %55, %54 : vector<8x8x8xf32>
    %c1_68 = arith.constant 1 : index
    %c1_69 = arith.constant 1 : index
    %c0_70 = arith.constant 0 : index
    %c0_71 = arith.constant 0 : index
    %57 = vector.load %arg3[%c1_68, %c1_69, %c0_70, %c0_71] : memref<2x9x8x8xf32, #tpu.memory_space<vmem>>, vector<1x8x8x8xf32>
    %58 = vector.shape_cast %57 : vector<1x8x8x8xf32> to vector<8x8x8xf32>
    %cst_72 = arith.constant -1.250000e-01 : f32
    %59 = vector.broadcast %cst_72 : f32 to vector<8x8x8xf32>
    %60 = arith.mulf %59, %58 : vector<8x8x8xf32>
    %61 = arith.addf %56, %60 : vector<8x8x8xf32>
    %62 = arith.addf %52, %61 : vector<8x8x8xf32>
    %c0_73 = arith.constant 0 : index
    %c0_74 = arith.constant 0 : index
    %c0_75 = arith.constant 0 : index
    %63 = vector.load %arg2[%c0_73, %c0_74, %c0_75] : memref<8x8x8xf32, #tpu.memory_space<vmem>>, vector<8x8x8xf32>
    tpu.vector_store %arg2[%c0_73, %c0_74, %c0_75], %62 {strides = array<i32>} : memref<8x8x8xf32, #tpu.memory_space<vmem>>, vector<8x8x8xf32>,
    return
  }
  func.func @transform_0(%arg0: i32) -> (i32, i32, i32, i32, i32) {
    %c0_i32 = arith.constant 0 : i32
    %c0_i32_0 = arith.constant 0 : i32
    %c0_i32_1 = arith.constant 0 : i32
    %c0_i32_2 = arith.constant 0 : i32
    %c0_i32_3 = arith.constant 0 : i32
    return %c0_i32, %c0_i32_0, %c0_i32_1, %c0_i32_2, %arg0 : i32, i32, i32, i32, i32
  }
  func.func @transform_1(%arg0: i32) -> (i32, i32, i32) {
    %c0_i32 = arith.constant 0 : i32
    %c0_i32_0 = arith.constant 0 : i32
    %c0_i32_1 = arith.constant 0 : i32
    return %c0_i32, %c0_i32_0, %arg0 : i32, i32, i32
  }
}

</mosaic_0001>

<llo_original>
// kernel: tpu_custom_call.1
$region0: #{tpu_custom_call.1}
  #allocation0 [shape = 'u32[]', space=smem, size = 0x4, offset = 0x4, fixed_abs, tag = 'smem constant byte address 0x4 - core index']
  #allocation1 [shape = 'u32[144,128]{1,0:T(1,128)}', space=vmem, size = 0x12000, scoped, tag = 'internal scratch']
  #allocation2 [shape = 'f32[2,9,8,8]{3,2,1,0:T(8,128)}', space=vmem, size = 0x12000, scoped, tag = 'scratch operand']
  %s0 = inlined_call_operand.vmem [shape: f32[2,2,9,9,8], index: 0, kind: input, shape index: {}]
  %s1 = inlined_call_operand.hbm [shape: f32[8,8,8], index: 1, kind: output, shape index: {}]
  %s2 = sld [smem:[#allocation0]]
  $region14: #{tpu_custom_call.1} parent=0
    _
  %s4 = ssub.s32 1, %s2
  %s5 = scalar_select 0, %s4, %s2
  $region1: #{tpu_custom_call.1} parent=0
    #allocation3 [shape = 'u8[32768]{0}', space=vmem, size = 0x8000, scoped, tag = 'output window, operand 0, single buffered']
    #allocation4 [shape = 's32[1]{0}', space=sflag, size = 0x4, scoped, tag = 'scoped memory for tpu_custom_call.1']
    %6 = vsyncpa [#allocation4], 0
    // Predicated region
    $region2: #{tpu_custom_call.1} parent=1 // pred_check
      _
    $region3: #{tpu_custom_call.1} parent=1 // pred_check_branch
      %8 = sbr.rel (0) target = $region5
    $region4: #{tpu_custom_call.1} parent=1 // pred_region
      _
    $region5: #{tpu_custom_call.1} parent=1 // pred_fallthru
      _
    %v9 = vld [vmem:[%s0] sm:$0xff]
    %v10 = vld [vmem:[%s0 + $0x10] sm:$0xff]
    %v11 = vld [vmem:[%s0 + $0x20] sm:$0xff]
    %v12 = vld [vmem:[%s0 + $0x30] sm:$0xff]
    %v13 = vld [vmem:[%s0 + $0x40] sm:$0xff]
    %v14 = vld [vmem:[%s0 + $0x50] sm:$0xff]
    %v15 = vld [vmem:[%s0 + $0x60] sm:$0xff]
    %v16 = vld [vmem:[%s0 + $0x70] sm:$0xff]
    %v17 = vld [vmem:[%s0 + $0x80] sm:$0xff]
    %v18 = vmul.f32 %v9, -0.125
    %v19 = vmul.f32 %v10, -0.125
    %v20 = vmul.f32 %v11, -0.125
    %v21 = vmul.f32 %v12, -0.125
    %v22 = vmul.f32 %v13, -0.125
    %v23 = vmul.f32 %v14, -0.125
    %v24 = vmul.f32 %v15, -0.125
    %v25 = vmul.f32 %v16, -0.125
    %v26 = vmul.f32 %v17, -0.125
    %s27 = scalar_lea.vmem %s0, 144
    %v28 = vld [vmem:[%s27] sm:$0xff]
    %v29 = vld [vmem:[%s27 + $0x10] sm:$0xff]
    %v30 = vld [vmem:[%s27 + $0x20] sm:$0xff]
    %v31 = vld [vmem:[%s27 + $0x30] sm:$0xff]
    %v32 = vld [vmem:[%s27 + $0x40] sm:$0xff]
    %v33 = vld [vmem:[%s27 + $0x50] sm:$0xff]
    %v34 = vld [vmem:[%s27 + $0x60] sm:$0xff]
    %v35 = vld [vmem:[%s27 + $0x70] sm:$0xff]
    %v36 = vld [vmem:[%s27 + $0x80] sm:$0xff]
    %v37 = vmul.f32 %v28, -0.375
    %v38 = vmul.f32 %v29, -0.375
    %v39 = vmul.f32 %v30, -0.375
    %v40 = vmul.f32 %v31, -0.375
    %v41 = vmul.f32 %v32, -0.375
    %v42 = vmul.f32 %v33, -0.375
    %v43 = vmul.f32 %v34, -0.375
    %v44 = vmul.f32 %v35, -0.375
    %v45 = vmul.f32 %v36, -0.375
    %v46 = vadd.f32 %v18, %v37
    %v47 = vadd.f32 %v19, %v38
    %v48 = vadd.f32 %v20, %v39
    %v49 = vadd.f32 %v21, %v40
    %v50 = vadd.f32 %v22, %v41
    %v51 = vadd.f32 %v23, %v42
    %v52 = vadd.f32 %v24, %v43
    %v53 = vadd.f32 %v25, %v44
    %v54 = vadd.f32 %v26, %v45
    %v55 = vld [vmem:[%s0 + $0x1] sm:$0xff]
    %v56 = vld [vmem:[%s0 + $0x11] sm:$0xff]
    %v57 = vld [vmem:[%s0 + $0x21] sm:$0xff]
    %v58 = vld [vmem:[%s0 + $0x31] sm:$0xff]
    %v59 = vld [vmem:[%s0 + $0x41] sm:$0xff]
    %v60 = vld [vmem:[%s0 + $0x51] sm:$0xff]
    %v61 = vld [vmem:[%s0 + $0x61] sm:$0xff]
    %v62 = vld [vmem:[%s0 + $0x71] sm:$0xff]
    %v63 = vld [vmem:[%s0 + $0x81] sm:$0xff]
    %v64 = vmul.f32 %v55, -0.375
    %v65 = vmul.f32 %v56, -0.375
    %v66 = vmul.f32 %v57, -0.375
    %v67 = vmul.f32 %v58, -0.375
    %v68 = vmul.f32 %v59, -0.375
    %v69 = vmul.f32 %v60, -0.375
    %v70 = vmul.f32 %v61, -0.375
    %v71 = vmul.f32 %v62, -0.375
    %v72 = vmul.f32 %v63, -0.375
    %v73 = vld [vmem:[%s27 + $0x1] sm:$0xff]
    %v74 = vld [vmem:[%s27 + $0x11] sm:$0xff]
    %v75 = vld [vmem:[%s27 + $0x21] sm:$0xff]
    %v76 = vld [vmem:[%s27 + $0x31] sm:$0xff]
    %v77 = vld [vmem:[%s27 + $0x41] sm:$0xff]
    %v78 = vld [vmem:[%s27 + $0x51] sm:$0xff]
    %v79 = vld [vmem:[%s27 + $0x61] sm:$0xff]
    %v80 = vld [vmem:[%s27 + $0x71] sm:$0xff]
    %v81 = vld [vmem:[%s27 + $0x81] sm:$0xff]
    %v82 = vmul.f32 %v73, -0.125
    %v83 = vmul.f32 %v74, -0.125
    %v84 = vmul.f32 %v75, -0.125
    %v85 = vmul.f32 %v76, -0.125
    %v86 = vmul.f32 %v77, -0.125
    %v87 = vmul.f32 %v78, -0.125
    %v88 = vmul.f32 %v79, -0.125
    %v89 = vmul.f32 %v80, -0.125
    %v90 = vmul.f32 %v81, -0.125
    %v91 = vadd.f32 %v64, %v82
    %v92 = vadd.f32 %v65, %v83
    %v93 = vadd.f32 %v66, %v84
    %v94 = vadd.f32 %v67, %v85
    %v95 = vadd.f32 %v68, %v86
    %v96 = vadd.f32 %v69, %v87
    %v97 = vadd.f32 %v70, %v88
    %v98 = vadd.f32 %v71, %v89
    %v99 = vadd.f32 %v72, %v90
    %v100 = vadd.f32 %v46, %v91
    %v101 = vadd.f32 %v47, %v92
    %v102 = vadd.f32 %v48, %v93
    %v103 = vadd.f32 %v49, %v94
    %v104 = vadd.f32 %v50, %v95
    %v105 = vadd.f32 %v51, %v96
    %v106 = vadd.f32 %v52, %v97
    %v107 = vadd.f32 %v53, %v98
    %v108 = vadd.f32 %v54, %v99
    %vm109 = vcmask 64512
    %110 = vst.msk [vmem:[#allocation2] sm:$0xff] %vm109, %v100
    %111 = vst.msk [vmem:[#allocation2 + $0x8] sm:$0xff] %vm109, %v101
    %112 = vst.msk [vmem:[#allocation2 + $0x10] sm:$0xff] %vm109, %v102
    %113 = vst.msk [vmem:[#allocation2 + $0x18] sm:$0xff] %vm109, %v103
    %114 = vst.msk [vmem:[#allocation2 + $0x20] sm:$0xff] %vm109, %v104
    %115 = vst.msk [vmem:[#allocation2 + $0x28] sm:$0xff] %vm109, %v105
    %116 = vst.msk [vmem:[#allocation2 + $0x30] sm:$0xff] %vm109, %v106
    %117 = vst.msk [vmem:[#allocation2 + $0x38] sm:$0xff] %vm109, %v107
    %118 = vst.msk [vmem:[#allocation2 + $0x40] sm:$0xff] %vm109, %v108
    %s119 = scalar_lea.vmem %s0, 288
    %v120 = vld [vmem:[%s119] sm:$0xff]
    %v121 = vld [vmem:[%s119 + $0x10] sm:$0xff]
    %v122 = vld [vmem:[%s119 + $0x20] sm:$0xff]
    %v123 = vld [vmem:[%s119 + $0x30] sm:$0xff]
    %v124 = vld [vmem:[%s119 + $0x40] sm:$0xff]
    %v125 = vld [vmem:[%s119 + $0x50] sm:$0xff]
    %v126 = vld [vmem:[%s119 + $0x60] sm:$0xff]
    %v127 = vld [vmem:[%s119 + $0x70] sm:$0xff]
    %v128 = vld [vmem:[%s119 + $0x80] sm:$0xff]
    %v129 = vmul.f32 %v120, -0.125
    %v130 = vmul.f32 %v121, -0.125
    %v131 = vmul.f32 %v122, -0.125
    %v132 = vmul.f32 %v123, -0.125
    %v133 = vmul.f32 %v124, -0.125
    %v134 = vmul.f32 %v125, -0.125
    %v135 = vmul.f32 %v126, -0.125
    %v136 = vmul.f32 %v127, -0.125
    %v137 = vmul.f32 %v128, -0.125
    %s138 = scalar_lea.vmem %s0, 432
    %v139 = vld [vmem:[%s138] sm:$0xff]
    %v140 = vld [vmem:[%s138 + $0x10] sm:$0xff]
    %v141 = vld [vmem:[%s138 + $0x20] sm:$0xff]
    %v142 = vld [vmem:[%s138 + $0x30] sm:$0xff]
    %v143 = vld [vmem:[%s138 + $0x40] sm:$0xff]
    %v144 = vld [vmem:[%s138 + $0x50] sm:$0xff]
    %v145 = vld [vmem:[%s138 + $0x60] sm:$0xff]
    %v146 = vld [vmem:[%s138 + $0x70] sm:$0xff]
    %v147 = vld [vmem:[%s138 + $0x80] sm:$0xff]
    %v148 = vmul.f32 %v139, -0.375
    %v149 = vmul.f32 %v140, -0.375
    %v150 = vmul.f32 %v141, -0.375
    %v151 = vmul.f32 %v142, -0.375
    %v152 = vmul.f32 %v143, -0.375
    %v153 = vmul.f32 %v144, -0.375
    %v154 = vmul.f32 %v145, -0.375
    %v155 = vmul.f32 %v146, -0.375
    %v156 = vmul.f32 %v147, -0.375
    %v157 = vadd.f32 %v129, %v148
    %v158 = vadd.f32 %v130, %v149
    %v159 = vadd.f32 %v131, %v150
    %v160 = vadd.f32 %v132, %v151
    %v161 = vadd.f32 %v133, %v152
    %v162 = vadd.f32 %v134, %v153
    %v163 = vadd.f32 %v135, %v154
    %v164 = vadd.f32 %v136, %v155
    %v165 = vadd.f32 %v137, %v156
    %v166 = vld [vmem:[%s119 + $0x1] sm:$0xff]
    %v167 = vld [vmem:[%s119 + $0x11] sm:$0xff]
    %v168 = vld [vmem:[%s119 + $0x21] sm:$0xff]
    %v169 = vld [vmem:[%s119 + $0x31] sm:$0xff]
    %v170 = vld [vmem:[%s119 + $0x41] sm:$0xff]
    %v171 = vld [vmem:[%s119 + $0x51] sm:$0xff]
    %v172 = vld [vmem:[%s119 + $0x61] sm:$0xff]
    %v173 = vld [vmem:[%s119 + $0x71] sm:$0xff]
    %v174 = vld [vmem:[%s119 + $0x81] sm:$0xff]
    %v175 = vmul.f32 %v166, -0.375
    %v176 = vmul.f32 %v167, -0.375
    %v177 = vmul.f32 %v168, -0.375
    %v178 = vmul.f32 %v169, -0.375
    %v179 = vmul.f32 %v170, -0.375
    %v180 = vmul.f32 %v171, -0.375
    %v181 = vmul.f32 %v172, -0.375
    %v182 = vmul.f32 %v173, -0.375
    %v183 = vmul.f32 %v174, -0.375
    %v184 = vld [vmem:[%s138 + $0x1] sm:$0xff]
    %v185 = vld [vmem:[%s138 + $0x11] sm:$0xff]
    %v186 = vld [vmem:[%s138 + $0x21] sm:$0xff]
    %v187 = vld [vmem:[%s138 + $0x31] sm:$0xff]
    %v188 = vld [vmem:[%s138 + $0x41] sm:$0xff]
    %v189 = vld [vmem:[%s138 + $0x51] sm:$0xff]
    %v190 = vld [vmem:[%s138 + $0x61] sm:$0xff]
    %v191 = vld [vmem:[%s138 + $0x71] sm:$0xff]
    %v192 = vld [vmem:[%s138 + $0x81] sm:$0xff]
    %v193 = vmul.f32 %v184, -0.125
    %v194 = vmul.f32 %v185, -0.125
    %v195 = vmul.f32 %v186, -0.125
    %v196 = vmul.f32 %v187, -0.125
    %v197 = vmul.f32 %v188, -0.125
    %v198 = vmul.f32 %v189, -0.125
    %v199 = vmul.f32 %v190, -0.125
    %v200 = vmul.f32 %v191, -0.125
    %v201 = vmul.f32 %v192, -0.125
    %v202 = vadd.f32 %v175, %v193
    %v203 = vadd.f32 %v176, %v194
    %v204 = vadd.f32 %v177, %v195
    %v205 = vadd.f32 %v178, %v196
    %v206 = vadd.f32 %v179, %v197
    %v207 = vadd.f32 %v180, %v198
    %v208 = vadd.f32 %v181, %v199
    %v209 = vadd.f32 %v182, %v200
    %v210 = vadd.f32 %v183, %v201
    %v211 = vadd.f32 %v157, %v202
    %v212 = vadd.f32 %v158, %v203
    %v213 = vadd.f32 %v159, %v204
    %v214 = vadd.f32 %v160, %v205
    %v215 = vadd.f32 %v161, %v206
    %v216 = vadd.f32 %v162, %v207
    %v217 = vadd.f32 %v163, %v208
    %v218 = vadd.f32 %v164, %v209
    %v219 = vadd.f32 %v165, %v210
    %s220 = scalar_lea.vmem [#allocation2], 72
    %221 = vst.msk [vmem:[%s220] sm:$0xff] %vm109, %v211
    %222 = vst.msk [vmem:[%s220 + $0x8] sm:$0xff] %vm109, %v212
    %223 = vst.msk [vmem:[%s220 + $0x10] sm:$0xff] %vm109, %v213
    %224 = vst.msk [vmem:[%s220 + $0x18] sm:$0xff] %vm109, %v214
    %225 = vst.msk [vmem:[%s220 + $0x20] sm:$0xff] %vm109, %v215
    %226 = vst.msk [vmem:[%s220 + $0x28] sm:$0xff] %vm109, %v216
    %227 = vst.msk [vmem:[%s220 + $0x30] sm:$0xff] %vm109, %v217
    %228 = vst.msk [vmem:[%s220 + $0x38] sm:$0xff] %vm109, %v218
    %229 = vst.msk [vmem:[%s220 + $0x40] sm:$0xff] %vm109, %v219
    %v230 = vld [vmem:[#allocation2] sm:$0xff]
    %v231 = vld [vmem:[#allocation2 + $0x8] sm:$0xff]
    %v232 = vld [vmem:[#allocation2 + $0x10] sm:$0xff]
    %v233 = vld [vmem:[#allocation2 + $0x18] sm:$0xff]
    %v234 = vld [vmem:[#allocation2 + $0x20] sm:$0xff]
    %v235 = vld [vmem:[#allocation2 + $0x28] sm:$0xff]
    %v236 = vld [vmem:[#allocation2 + $0x30] sm:$0xff]
    %v237 = vld [vmem:[#allocation2 + $0x38] sm:$0xff]
    %v238 = vmul.f32 %v230, -0.125
    %v239 = vmul.f32 %v231, -0.125
    %v240 = vmul.f32 %v232, -0.125
    %v241 = vmul.f32 %v233, -0.125
    %v242 = vmul.f32 %v234, -0.125
    %v243 = vmul.f32 %v235, -0.125
    %v244 = vmul.f32 %v236, -0.125
    %v245 = vmul.f32 %v237, -0.125
    %v246 = vld [vmem:[%s220] sm:$0xff]
    %v247 = vld [vmem:[%s220 + $0x8] sm:$0xff]
    %v248 = vld [vmem:[%s220 + $0x10] sm:$0xff]
    %v249 = vld [vmem:[%s220 + $0x18] sm:$0xff]
    %v250 = vld [vmem:[%s220 + $0x20] sm:$0xff]
    %v251 = vld [vmem:[%s220 + $0x28] sm:$0xff]
    %v252 = vld [vmem:[%s220 + $0x30] sm:$0xff]
    %v253 = vld [vmem:[%s220 + $0x38] sm:$0xff]
    %v254 = vmul.f32 %v246, -0.375
    %v255 = vmul.f32 %v247, -0.375
    %v256 = vmul.f32 %v248, -0.375
    %v257 = vmul.f32 %v249, -0.375
    %v258 = vmul.f32 %v250, -0.375
    %v259 = vmul.f32 %v251, -0.375
    %v260 = vmul.f32 %v252, -0.375
    %v261 = vmul.f32 %v253, -0.375
    %v262 = vadd.f32 %v238, %v254
    %v263 = vadd.f32 %v239, %v255
    %v264 = vadd.f32 %v240, %v256
    %v265 = vadd.f32 %v241, %v257
    %v266 = vadd.f32 %v242, %v258
    %v267 = vadd.f32 %v243, %v259
    %v268 = vadd.f32 %v244, %v260
    %v269 = vadd.f32 %v245, %v261
    %s270 = scalar_lea.vmem [#allocation2], 8
    %v271 = vld [vmem:[%s270] sm:$0xff]
    %v272 = vld [vmem:[%s270 + $0x8] sm:$0xff]
    %v273 = vld [vmem:[%s270 + $0x10] sm:$0xff]
    %v274 = vld [vmem:[%s270 + $0x18] sm:$0xff]
    %v275 = vld [vmem:[%s270 + $0x20] sm:$0xff]
    %v276 = vld [vmem:[%s270 + $0x28] sm:$0xff]
    %v277 = vld [vmem:[%s270 + $0x30] sm:$0xff]
    %v278 = vld [vmem:[%s270 + $0x38] sm:$0xff]
    %v279 = vmul.f32 %v271, -0.375
    %v280 = vmul.f32 %v272, -0.375
    %v281 = vmul.f32 %v273, -0.375
    %v282 = vmul.f32 %v274, -0.375
    %v283 = vmul.f32 %v275, -0.375
    %v284 = vmul.f32 %v276, -0.375
    %v285 = vmul.f32 %v277, -0.375
    %v286 = vmul.f32 %v278, -0.375
    %s287 = scalar_lea.vmem [#allocation2], 80
    %v288 = vld [vmem:[%s287] sm:$0xff]
    %v289 = vld [vmem:[%s287 + $0x8] sm:$0xff]
    %v290 = vld [vmem:[%s287 + $0x10] sm:$0xff]
    %v291 = vld [vmem:[%s287 + $0x18] sm:$0xff]
    %v292 = vld [vmem:[%s287 + $0x20] sm:$0xff]
    %v293 = vld [vmem:[%s287 + $0x28] sm:$0xff]
    %v294 = vld [vmem:[%s287 + $0x30] sm:$0xff]
    %v295 = vld [vmem:[%s287 + $0x38] sm:$0xff]
    %v296 = vmul.f32 %v288, -0.125
    %v297 = vmul.f32 %v289, -0.125
    %v298 = vmul.f32 %v290, -0.125
    %v299 = vmul.f32 %v291, -0.125
    %v300 = vmul.f32 %v292, -0.125
    %v301 = vmul.f32 %v293, -0.125
    %v302 = vmul.f32 %v294, -0.125
    %v303 = vmul.f32 %v295, -0.125
    %v304 = vadd.f32 %v279, %v296
    %v305 = vadd.f32 %v280, %v297
    %v306 = vadd.f32 %v281, %v298
    %v307 = vadd.f32 %v282, %v299
    %v308 = vadd.f32 %v283, %v300
    %v309 = vadd.f32 %v284, %v301
    %v310 = vadd.f32 %v285, %v302
    %v311 = vadd.f32 %v286, %v303
    %v312 = vadd.f32 %v262, %v304
    %v313 = vadd.f32 %v263, %v305
    %v314 = vadd.f32 %v264, %v306
    %v315 = vadd.f32 %v265, %v307
    %v316 = vadd.f32 %v266, %v308
    %v317 = vadd.f32 %v267, %v309
    %v318 = vadd.f32 %v268, %v310
    %v319 = vadd.f32 %v269, %v311
    %320 = vst.msk [vmem:[#allocation3] sm:$0xff] %vm109, %v312
    %321 = vst.msk [vmem:[#allocation3 + $0x8] sm:$0xff] %vm109, %v313
    %322 = vst.msk [vmem:[#allocation3 + $0x10] sm:$0xff] %vm109, %v314
    %323 = vst.msk [vmem:[#allocation3 + $0x18] sm:$0xff] %vm109, %v315
    %324 = vst.msk [vmem:[#allocation3 + $0x20] sm:$0xff] %vm109, %v316
    %325 = vst.msk [vmem:[#allocation3 + $0x28] sm:$0xff] %vm109, %v317
    %326 = vst.msk [vmem:[#allocation3 + $0x30] sm:$0xff] %vm109, %v318
    %327 = vst.msk [vmem:[#allocation3 + $0x38] sm:$0xff] %vm109, %v319
    // Predicated region
    $region6: #{tpu_custom_call.1} parent=1 // pred_check
      _
    $region7: #{tpu_custom_call.1} parent=1 // pred_check_branch
      %329 = sbr.rel (0) target = $region9
    $region8: #{tpu_custom_call.1} parent=1 // pred_region
      %s331 = ssub.s32 1024, 1024
      %332 = vsyncadd [#allocation4], %s331
      %s333 = sshll.u32 [#allocation3], 4
      %s334 = int_to_ptr.vmem [resolvable:$true] %s333
      %339 = dma.vmem_to_hbm [thread:$0]  %s334, 1024, %s1, [#allocation4], 128, 128, 8
    $region9: #{tpu_custom_call.1} parent=1 // pred_fallthru
      _
    // Predicated region
    $region10: #{tpu_custom_call.1} parent=1 // pred_check
      _
    $region11: #{tpu_custom_call.1} parent=1 // pred_check_branch
      %341 = sbr.rel (0) target = $region13
    $region12: #{tpu_custom_call.1} parent=1 // pred_region
      %342 = dma.done [#allocation4], 1024
    $region13: #{tpu_custom_call.1} parent=1 // pred_fallthru
      _
    %343 = vsyncpa [#allocation4], 1

</llo_original>
